<compile_context>
chip_gen: v7x
topology: tpu7x:2x2x1
jax: 0.10.0
libtpu: 0.0.40
codegen_flags: <defaults>
</compile_context>

<pallas_src>
import jax
import jax.numpy as jnp
from jax.experimental import pallas as pl
from jax.experimental.pallas import tpu as pltpu


def _round_up(v, m):
    return -(-v // m) * m


def _normal_mlp_kernel(x_ref, w1_ref, b1_ref, w2_ref, o_ref):
    # x_ref:  (TM, in_p)      batch tile (input dtype)
    # w1_ref: (in_p, lat_p)   resident weight (pre-transposed, zero-padded)
    # b1_ref: (1, lat_p)      f32 bias row (zero-padded)
    # w2_ref: (lat_p, out_p)  resident projection weight
    # o_ref:  (TM, out_p)
    w1 = w1_ref[...]
    w2 = w2_ref[...]

    # activation (ReLU) on the raw input, per the module's forward();
    # elementwise math stays in the input dtype (f32 on v5e — no bf16 VPU),
    # only the MXU operands are cast to compute_dtype.
    h = jnp.maximum(x_ref[...], 0).astype(w1.dtype)
    # dropout with p = 0 -> identity (no-op)

    # linear: h @ W1 + b1   (MXU, f32 accumulation; bias add in f32)
    y = jnp.dot(h, w1, preferred_element_type=jnp.float32) + b1_ref[...]

    # projection: y @ W2 (no bias), f32 accumulation
    out = jnp.dot(y.astype(w2.dtype), w2, preferred_element_type=jnp.float32)
    o_ref[...] = out.astype(o_ref.dtype)


def prepare_normal_mlp_params(w1, b1, w2, *, compute_dtype=jnp.float32):
    """One-time parameter prep (call at load time, NOT per forward).

    w1: (latent, in) torch nn.Linear layout; b1: (latent,); w2: (out, latent).
    Returns padded, pre-transposed, lane-dense parameters.
    """
    latent_dim, in_dim = w1.shape
    out_dim = w2.shape[0]
    in_p = _round_up(in_dim, 128)
    lat_p = _round_up(latent_dim, 128)
    out_p = _round_up(out_dim, 128)

    w1_t = jnp.zeros((in_p, lat_p), compute_dtype).at[:in_dim, :latent_dim].set(
        jnp.transpose(w1).astype(compute_dtype))
    w2_t = jnp.zeros((lat_p, out_p), compute_dtype).at[:latent_dim, :out_dim].set(
        jnp.transpose(w2).astype(compute_dtype))
    b1_row = jnp.zeros((1, lat_p), jnp.float32).at[0, :latent_dim].set(
        b1.astype(jnp.float32))

    return {
        "w1_t": w1_t, "b1_row": b1_row, "w2_t": w2_t,
        "dims": (in_dim, latent_dim, out_dim),
        "compute_dtype": compute_dtype,
    }


def normal_mlp_forward(x, params, *, tm=None):
    """x: (B, in_dim). params: output of prepare_normal_mlp_params."""
    w1_t, b1_row, w2_t = params["w1_t"], params["b1_row"], params["w2_t"]
    in_dim, latent_dim, out_dim = params["dims"]
    compute_dtype = params["compute_dtype"]
    in_p, lat_p = w1_t.shape
    out_p = w2_t.shape[1]

    B = x.shape[0]
    assert x.shape[1] == in_dim

    # Row alignment: 16 sublane rows when any bf16 operand is in play.
    two_byte = (jnp.dtype(x.dtype).itemsize == 2
                or jnp.dtype(compute_dtype).itemsize == 2)
    row_align = 16 if two_byte else 8

    # Balanced batch tiling: ~512 rows/step; >=2 steps for compute-relevant
    # batches so a parallel grid axis shards across both v7x TensorCores.
    if tm is None:
        steps = pl.cdiv(B, 512)
        if steps == 1 and B >= 256:
            steps = 2
        tm = _round_up(pl.cdiv(B, steps), row_align)
    steps = pl.cdiv(B, tm)
    B_p = steps * tm

    # Skip the input pad copy entirely when already aligned.
    if B_p == B and in_p == in_dim:
        x_p = x
    else:
        x_p = jnp.zeros((B_p, in_p), x.dtype).at[:B, :in_dim].set(x)

    itemsize_x = jnp.dtype(x.dtype).itemsize
    itemsize_c = jnp.dtype(compute_dtype).itemsize

    # VMEM budget: double-buffered x/out tiles, single-buffered weights,
    # f32 (tm, lat_p) intermediate; +50% headroom, capped at 100 MiB
    # (well under v5e/v6e 128 MiB physical; compute-sized, so also safe on
    # v7x's 64 MiB for these resident-weight shapes).
    needed = (2 * tm * in_p * itemsize_x          # x tile, double-buffered
              + 2 * tm * out_p * itemsize_x       # out tile, double-buffered
              + (in_p * lat_p + lat_p * out_p) * itemsize_c  # weights, x1
              + lat_p * 4                         # bias row
              + tm * lat_p * 4)                   # f32 y intermediate
    vmem_limit = min(int(needed * 1.5) + (1 << 20), 100 * 1024 * 1024)

    flops = 2 * B_p * (in_p * lat_p + lat_p * out_p)
    bytes_accessed = (itemsize_x * B_p * (in_p + out_p)
                      + itemsize_c * (in_p * lat_p + lat_p * out_p)
                      + 4 * lat_p)

    out_padded = pl.pallas_call(
        _normal_mlp_kernel,
        out_shape=jax.ShapeDtypeStruct((B_p, out_p), x.dtype),
        grid_spec=pltpu.PrefetchScalarGridSpec(
            num_scalar_prefetch=0,
            grid=(steps,),
            in_specs=[
                pl.BlockSpec((tm, in_p), lambda i: (i, 0)),
                # Constant index_maps -> single-buffer the resident params.
                pl.BlockSpec((in_p, lat_p), lambda i: (0, 0),
                             pipeline_mode=pl.Buffered(1)),
                pl.BlockSpec((1, lat_p), lambda i: (0, 0),
                             pipeline_mode=pl.Buffered(1)),
                pl.BlockSpec((lat_p, out_p), lambda i: (0, 0),
                             pipeline_mode=pl.Buffered(1)),
            ],
            out_specs=pl.BlockSpec((tm, out_p), lambda i: (i, 0)),
        ),
        compiler_params=pltpu.CompilerParams(
            dimension_semantics=("parallel",),
            vmem_limit_bytes=vmem_limit),
        cost_estimate=pl.CostEstimate(
            flops=flops, transcendentals=0, bytes_accessed=bytes_accessed),
    )(x_p, w1_t, b1_row, w2_t)

    # Skip the output slice when already aligned.
    if B_p == B and out_p == out_dim:
        return out_padded
    return out_padded[:B, :out_dim]


def _reference_forward(x, w1, b1, w2):
    h = jnp.maximum(x, 0.0)
    y = h @ w1.T + b1
    return y @ w2.T


if __name__ == "__main__":
    # Small shapes consistent with the module: in_dim=32, latent_dim=64, out_dim=16
    B, in_dim, latent_dim, out_dim = 16, 32, 64, 16

    key = jax.random.PRNGKey(0)
    kx, kw1, kb1, kw2 = jax.random.split(key, 4)

    x = jax.random.normal(kx, (B, in_dim), dtype=jnp.float32)
    # Deterministic synthetic parameters (torch nn.Linear layouts):
    w1 = jax.random.normal(kw1, (latent_dim, in_dim), dtype=jnp.float32) * (1.0 / in_dim ** 0.5)
    b1 = jax.random.normal(kb1, (latent_dim,), dtype=jnp.float32) * 0.01
    w2 = jax.random.normal(kw2, (out_dim, latent_dim), dtype=jnp.float32) * (1.0 / latent_dim ** 0.5)

    ref = _reference_forward(x, w1, b1, w2)

    # f32 compute path (default; tight tolerance).
    params_f32 = prepare_normal_mlp_params(w1, b1, w2, compute_dtype=jnp.float32)
    out = jax.block_until_ready(normal_mlp_forward(x, params_f32))
    assert out.shape == (B, out_dim)
    assert jnp.allclose(out, ref, atol=1e-4, rtol=1e-4), "f32 mismatch vs reference"

    # bf16 MXU-operand path (recommended on v6e/v7x; looser tolerance).
    params_bf16 = prepare_normal_mlp_params(w1, b1, w2, compute_dtype=jnp.bfloat16)
    out_bf16 = jax.block_until_ready(normal_mlp_forward(x, params_bf16))
    assert out_bf16.shape == (B, out_dim)
    assert jnp.allclose(out_bf16, ref, atol=2e-2, rtol=2e-2), "bf16 mismatch vs reference"

    print("KERNEL_OK")
</pallas_src>

<mosaic_0001>
module attributes {stable_mosaic.version = 11 : i64} {
  func.func @_normal_mlp_kernel(%arg0: i32, %arg1: memref<16x128xf32, #tpu.memory_space<vmem>>, %arg2: memref<128x128xf32, #tpu.memory_space<vmem>>, %arg3: memref<1x128xf32, #tpu.memory_space<vmem>>, %arg4: memref<128x128xf32, #tpu.memory_space<vmem>>, %arg5: memref<16x128xf32, #tpu.memory_space<vmem>>) attributes {dimension_semantics = [#tpu.dimension_semantics<parallel>], iteration_bounds = array<i64: 1>, scalar_prefetch = 0 : i64, scratch_operands = 0 : i64, tpu.core_type = #tpu.core_type<tc>, window_params = [{transform_indices = @transform_0, window_bounds = array<i64: 16, 128>}, {pipeline_mode = #tpu.pipeline_mode<synchronous>, transform_indices = @transform_1, window_bounds = array<i64: 128, 128>}, {pipeline_mode = #tpu.pipeline_mode<synchronous>, transform_indices = @transform_2, window_bounds = array<i64: 1, 128>}, {pipeline_mode = #tpu.pipeline_mode<synchronous>, transform_indices = @transform_3, window_bounds = array<i64: 128, 128>}, {transform_indices = @transform_4, window_bounds = array<i64: 16, 128>}]} {
    %c0 = arith.constant 0 : index
    %c0_0 = arith.constant 0 : index
    %0 = vector.load %arg2[%c0, %c0_0] : memref<128x128xf32, #tpu.memory_space<vmem>>, vector<128x128xf32>
    %c0_1 = arith.constant 0 : index
    %c0_2 = arith.constant 0 : index
    %1 = vector.load %arg4[%c0_1, %c0_2] : memref<128x128xf32, #tpu.memory_space<vmem>>, vector<128x128xf32>
    %c0_3 = arith.constant 0 : index
    %c0_4 = arith.constant 0 : index
    %2 = vector.load %arg1[%c0_3, %c0_4] : memref<16x128xf32, #tpu.memory_space<vmem>>, vector<16x128xf32>
    %cst = arith.constant 0.000000e+00 : f32
    %3 = vector.broadcast %cst : f32 to vector<16x128xf32>
    %4 = arith.maximumf %2, %3 : vector<16x128xf32>
    %cst_5 = arith.constant dense<0.000000e+00> : vector<16x128xf32>
    %5 = tpu.matmul %4, %0, %cst_5 {dimension_numbers = #tpu.dot_dimension_numbers<[1], [0], [0], [1], [0, 0, 1, 1], [], []>} : vector<16x128xf32>, vector<128x128xf32>, vector<16x128xf32> -> vector<16x128xf32>
    %c0_6 = arith.constant 0 : index
    %c0_7 = arith.constant 0 : index
    %6 = vector.load %arg3[%c0_6, %c0_7] : memref<1x128xf32, #tpu.memory_space<vmem>>, vector<1x128xf32>
    %7 = vector.broadcast %6 : vector<1x128xf32> to vector<16x128xf32>
    %8 = arith.addf %5, %7 : vector<16x128xf32>
    %cst_8 = arith.constant dense<0.000000e+00> : vector<16x128xf32>
    %9 = tpu.matmul %8, %1, %cst_8 {dimension_numbers = #tpu.dot_dimension_numbers<[1], [0], [0], [1], [0, 0, 1, 1], [], []>} : vector<16x128xf32>, vector<128x128xf32>, vector<16x128xf32> -> vector<16x128xf32>
    %c0_9 = arith.constant 0 : index
    %c0_10 = arith.constant 0 : index
    %10 = vector.load %arg5[%c0_9, %c0_10] : memref<16x128xf32, #tpu.memory_space<vmem>>, vector<16x128xf32>
    tpu.vector_store %arg5[%c0_9, %c0_10], %9 {strides = array<i32>} : memref<16x128xf32, #tpu.memory_space<vmem>>, vector<16x128xf32>,
    return
  }
  func.func @transform_0(%arg0: i32) -> (i32, i32) {
    %c0_i32 = arith.constant 0 : i32
    %c0_i32_0 = arith.constant 0 : i32
    return %arg0, %c0_i32 : i32, i32
  }
  func.func @transform_1(%arg0: i32) -> (i32, i32) {
    %c0_i32 = arith.constant 0 : i32
    %c0_i32_0 = arith.constant 0 : i32
    %c0_i32_1 = arith.constant 0 : i32
    return %c0_i32, %c0_i32_0 : i32, i32
  }
  func.func @transform_2(%arg0: i32) -> (i32, i32) {
    %c0_i32 = arith.constant 0 : i32
    %c0_i32_0 = arith.constant 0 : i32
    %c0_i32_1 = arith.constant 0 : i32
    return %c0_i32, %c0_i32_0 : i32, i32
  }
  func.func @transform_3(%arg0: i32) -> (i32, i32) {
    %c0_i32 = arith.constant 0 : i32
    %c0_i32_0 = arith.constant 0 : i32
    %c0_i32_1 = arith.constant 0 : i32
    return %c0_i32, %c0_i32_0 : i32, i32
  }
  func.func @transform_4(%arg0: i32) -> (i32, i32) {
    %c0_i32 = arith.constant 0 : i32
    %c0_i32_0 = arith.constant 0 : i32
    return %arg0, %c0_i32 : i32, i32
  }
}

</mosaic_0001>

<llo_original>
// kernel: tpu_custom_call.1
$region0: #{tpu_custom_call.1}
  #allocation0 [shape = 'u32[]', space=smem, size = 0x4, offset = 0x4, fixed_abs, tag = 'smem constant byte address 0x4 - core index']
  #allocation1 [shape = 'u32[144,128]{1,0:T(1,128)}', space=vmem, size = 0x12000, scoped, tag = 'internal scratch']
  %s0 = inlined_call_operand.hbm [shape: f32[16,128], index: 0, kind: input, shape index: {}]
  %s1 = inlined_call_operand.hbm [shape: f32[128,128], index: 1, kind: input, shape index: {}]
  %s2 = inlined_call_operand.vmem [shape: f32[1,128], index: 2, kind: input, shape index: {}]
  %s3 = inlined_call_operand.hbm [shape: f32[128,128], index: 3, kind: input, shape index: {}]
  %s4 = inlined_call_operand.hbm [shape: f32[16,128], index: 4, kind: output, shape index: {}]
  %s5 = sld [smem:[#allocation0]]
  $region38: #{tpu_custom_call.1} parent=0
    _
  %s7 = ssub.s32 1, %s5
  %s8 = scalar_select 0, %s7, %s5
  $region1: #{tpu_custom_call.1} parent=0
    #allocation2 [shape = 'u8[8192]{0}', space=vmem, size = 0x2000, scoped, tag = 'input window, operand 0, single buffered']
    #allocation3 [shape = 's32[1]{0}', space=sflag, size = 0x4, scoped, tag = 'scoped memory for tpu_custom_call.1']
    #allocation4 [shape = 's32[1]{0}', space=sflag, size = 0x4, scoped, tag = 'scoped memory for tpu_custom_call.1']
    #allocation5 [shape = 'u8[65536]{0}', space=vmem, size = 0x10000, scoped, tag = 'input window, operand 1, single buffered']
    #allocation6 [shape = 's32[1]{0}', space=sflag, size = 0x4, scoped, tag = 'scoped memory for tpu_custom_call.1']
    #allocation7 [shape = 'u8[65536]{0}', space=vmem, size = 0x10000, scoped, tag = 'input window, operand 3, single buffered']
    #allocation8 [shape = 'u8[8192]{0}', space=vmem, size = 0x2000, scoped, tag = 'output window, operand 0, single buffered']
    %9 = vsyncpa [#allocation3], 0
    %10 = vsyncpa [#allocation6], 0
    %11 = vsyncpa [#allocation4], 0
    // Predicated region
    $region2: #{tpu_custom_call.1} parent=1 // pred_check
      _
    $region3: #{tpu_custom_call.1} parent=1 // pred_check_branch
      %13 = sbr.rel (0) target = $region5
    $region4: #{tpu_custom_call.1} parent=1 // pred_region
      %s15 = ssub.s32 256, 256
      %16 = vsyncadd [#allocation3], %s15
      %s17 = sshll.u32 [#allocation2], 4
      %s18 = int_to_ptr.vmem [resolvable:$true] %s17
      %23 = dma.hbm_to_vmem [thread:$0]  %s0, 256, %s18, [#allocation3], 128, 128, 8
    $region5: #{tpu_custom_call.1} parent=1 // pred_fallthru
      _
    // Predicated region
    $region6: #{tpu_custom_call.1} parent=1 // pred_check
      _
    $region7: #{tpu_custom_call.1} parent=1 // pred_check_branch
      %25 = sbr.rel (0) target = $region9
    $region8: #{tpu_custom_call.1} parent=1 // pred_region
      %s27 = ssub.s32 2048, 2048
      %28 = vsyncadd [#allocation6], %s27
      %s29 = sshll.u32 [#allocation5], 4
      %s30 = int_to_ptr.vmem [resolvable:$true] %s29
      %35 = dma.hbm_to_vmem [thread:$0]  %s1, 2048, %s30, [#allocation6], 128, 128, 8
    $region9: #{tpu_custom_call.1} parent=1 // pred_fallthru
      _
    // Predicated region
    $region10: #{tpu_custom_call.1} parent=1 // pred_check
      _
    $region11: #{tpu_custom_call.1} parent=1 // pred_check_branch
      %37 = sbr.rel (0) target = $region13
    $region12: #{tpu_custom_call.1} parent=1 // pred_region
      _
    $region13: #{tpu_custom_call.1} parent=1 // pred_fallthru
      _
    // Predicated region
    $region14: #{tpu_custom_call.1} parent=1 // pred_check
      _
    $region15: #{tpu_custom_call.1} parent=1 // pred_check_branch
      %39 = sbr.rel (0) target = $region17
    $region16: #{tpu_custom_call.1} parent=1 // pred_region
      %s41 = ssub.s32 2048, 2048
      %42 = vsyncadd [#allocation6], %s41
      %s43 = sshll.u32 [#allocation7], 4
      %s44 = int_to_ptr.vmem [resolvable:$true] %s43
      %49 = dma.hbm_to_vmem [thread:$0]  %s3, 2048, %s44, [#allocation6], 128, 128, 8
    $region17: #{tpu_custom_call.1} parent=1 // pred_fallthru
      _
    // Predicated region
    $region18: #{tpu_custom_call.1} parent=1 // pred_check
      _
    $region19: #{tpu_custom_call.1} parent=1 // pred_check_branch
      %51 = sbr.rel (0) target = $region21
    $region20: #{tpu_custom_call.1} parent=1 // pred_region
      %52 = dma.done [#allocation3], 256
    $region21: #{tpu_custom_call.1} parent=1 // pred_fallthru
      _
    // Predicated region
    $region22: #{tpu_custom_call.1} parent=1 // pred_check
      _
    $region23: #{tpu_custom_call.1} parent=1 // pred_check_branch
      %54 = sbr.rel (0) target = $region25
    $region24: #{tpu_custom_call.1} parent=1 // pred_region
      %55 = dma.done [#allocation6], 2048
    $region25: #{tpu_custom_call.1} parent=1 // pred_fallthru
      _
    // Predicated region
    $region26: #{tpu_custom_call.1} parent=1 // pred_check
      _
    $region27: #{tpu_custom_call.1} parent=1 // pred_check_branch
      %57 = sbr.rel (0) target = $region29
    $region28: #{tpu_custom_call.1} parent=1 // pred_region
      %58 = dma.done [#allocation6], 2048
    $region29: #{tpu_custom_call.1} parent=1 // pred_fallthru
      _
    %v59 = vld [vmem:[#allocation5] sm:$0xff]
    %v60 = vld [vmem:[#allocation5 + $0x8] sm:$0xff]
    %v61 = vld [vmem:[#allocation5 + $0x10] sm:$0xff]
    %v62 = vld [vmem:[#allocation5 + $0x18] sm:$0xff]
    %v63 = vld [vmem:[#allocation5 + $0x20] sm:$0xff]
    %v64 = vld [vmem:[#allocation5 + $0x28] sm:$0xff]
    %v65 = vld [vmem:[#allocation5 + $0x30] sm:$0xff]
    %v66 = vld [vmem:[#allocation5 + $0x38] sm:$0xff]
    %v67 = vld [vmem:[#allocation5 + $0x40] sm:$0xff]
    %v68 = vld [vmem:[#allocation5 + $0x48] sm:$0xff]
    %v69 = vld [vmem:[#allocation5 + $0x50] sm:$0xff]
    %v70 = vld [vmem:[#allocation5 + $0x58] sm:$0xff]
    %v71 = vld [vmem:[#allocation5 + $0x60] sm:$0xff]
    %v72 = vld [vmem:[#allocation5 + $0x68] sm:$0xff]
    %v73 = vld [vmem:[#allocation5 + $0x70] sm:$0xff]
    %v74 = vld [vmem:[#allocation5 + $0x78] sm:$0xff]
    %v75 = vld [vmem:[#allocation7] sm:$0xff]
    %v76 = vld [vmem:[#allocation7 + $0x8] sm:$0xff]
    %v77 = vld [vmem:[#allocation7 + $0x10] sm:$0xff]
    %v78 = vld [vmem:[#allocation7 + $0x18] sm:$0xff]
    %v79 = vld [vmem:[#allocation7 + $0x20] sm:$0xff]
    %v80 = vld [vmem:[#allocation7 + $0x28] sm:$0xff]
    %v81 = vld [vmem:[#allocation7 + $0x30] sm:$0xff]
    %v82 = vld [vmem:[#allocation7 + $0x38] sm:$0xff]
    %v83 = vld [vmem:[#allocation7 + $0x40] sm:$0xff]
    %v84 = vld [vmem:[#allocation7 + $0x48] sm:$0xff]
    %v85 = vld [vmem:[#allocation7 + $0x50] sm:$0xff]
    %v86 = vld [vmem:[#allocation7 + $0x58] sm:$0xff]
    %v87 = vld [vmem:[#allocation7 + $0x60] sm:$0xff]
    %v88 = vld [vmem:[#allocation7 + $0x68] sm:$0xff]
    %v89 = vld [vmem:[#allocation7 + $0x70] sm:$0xff]
    %v90 = vld [vmem:[#allocation7 + $0x78] sm:$0xff]
    %v91 = vld [vmem:[#allocation2] sm:$0xff]
    %v92 = vld [vmem:[#allocation2 + $0x8] sm:$0xff]
    %v93 = vmax.f32 %v91, 0.0
    %v94 = vmax.f32 %v92, 0.0
    %v95 = vld [vmem:[%s2] sm:$0x1]
    %v97 = vlaneseq
    %v98 = vshrl.u32 %v97, 7
    %v99 = vsub.s32 0, %v98
    %v100 = vrot.slane %v95, %v99
    %102 = vmatprep.subr.mxu0 0.0
    %103 = vmatpush1.msra.mxu0 %v59
    %104 = vmatprep.subr.mxu0 0.0
    %105 = vmatpush1.msra.mxu0 %v60
    %106 = vmatprep.subr.mxu0 0.0
    %107 = vmatpush1.msra.mxu0 %v61
    %108 = vmatprep.subr.mxu0 0.0
    %109 = vmatpush1.msra.mxu0 %v62
    %110 = vmatprep.subr.mxu0 0.0
    %111 = vmatpush1.msra.mxu0 %v63
    %112 = vmatprep.subr.mxu0 0.0
    %113 = vmatpush1.msra.mxu0 %v64
    %114 = vmatprep.subr.mxu0 0.0
    %115 = vmatpush1.msra.mxu0 %v65
    %116 = vmatprep.subr.mxu0 0.0
    %117 = vmatpush1.msra.mxu0 %v66
    %118 = vmatprep.subr.mxu0 0.0
    %119 = vmatpush1.msra.mxu0 %v67
    %120 = vmatprep.subr.mxu0 0.0
    %121 = vmatpush1.msra.mxu0 %v68
    %122 = vmatprep.subr.mxu0 0.0
    %123 = vmatpush1.msra.mxu0 %v69
    %124 = vmatprep.subr.mxu0 0.0
    %125 = vmatpush1.msra.mxu0 %v70
    %126 = vmatprep.subr.mxu0 0.0
    %127 = vmatpush1.msra.mxu0 %v71
    %128 = vmatprep.subr.mxu0 0.0
    %129 = vmatpush1.msra.mxu0 %v72
    %130 = vmatprep.subr.mxu0 0.0
    %131 = vmatpush1.msra.mxu0 %v73
    %132 = vmatprep.subr.mxu0 0.0
    %133 = vmatpush1.msra.mxu0 %v74
    %134 = vmatprep.subr.mxu0 0.0
    %135 = vmatpush1.msra.mxu0 0.0
    %136 = vmatprep.subr.mxu0 0.0
    %137 = vmatpush1.msra.mxu0 0.0
    %138 = vmatprep.subr.mxu0 0.0
    %139 = vmatpush1.msra.mxu0 0.0
    %140 = vmatprep.subr.mxu0 0.0
    %141 = vmatpush1.msra.mxu0 0.0
    %142 = vmatprep.subr.mxu0 0.0
    %143 = vmatpush1.msra.mxu0 0.0
    %144 = vmatprep.subr.mxu0 0.0
    %145 = vmatpush1.msra.mxu0 0.0
    %146 = vmatprep.subr.mxu0 0.0
    %147 = vmatpush1.msra.mxu0 0.0
    %148 = vmatprep.subr.mxu0 0.0
    %149 = vmatpush1.msra.mxu0 0.0
    %150 = vmatprep.subr.mxu0 0.0
    %151 = vmatpush1.msra.mxu0 0.0
    %152 = vmatprep.subr.mxu0 0.0
    %153 = vmatpush1.msra.mxu0 0.0
    %154 = vmatprep.subr.mxu0 0.0
    %155 = vmatpush1.msra.mxu0 0.0
    %156 = vmatprep.subr.mxu0 0.0
    %157 = vmatpush1.msra.mxu0 0.0
    %158 = vmatprep.subr.mxu0 0.0
    %159 = vmatpush1.msra.mxu0 0.0
    %160 = vmatprep.subr.mxu0 0.0
    %161 = vmatpush1.msra.mxu0 0.0
    %162 = vmatprep.subr.mxu0 0.0
    %163 = vmatpush1.msra.mxu0 0.0
    %164 = vmatprep.subr.mxu0 0.0
    %165 = vmatpush1.msra.mxu0 0.0
    %166 = vmatprep.mubr.f32.mxu0 0.0
    %167 = vmatmul.mubr.f32.gmra.mrb[0].mxu0 %v93
    %v168 = vpop.f32.mrb[0].mxu0
    %v169 = vadd.f32 %v100, %v168
    %v170 = vpop.f32.mrb[0].mxu0
    %171 = vmatprep.mubr.f32.mxu0 0.0
    %172 = vmatmul.mubr.f32.gmra.mrb[0].mxu0 %v94
    %v173 = vpop.f32.mrb[0].mxu0
    %v174 = vadd.f32 %v100, %v173
    %v175 = vpop.f32.mrb[0].mxu0
    %176 = vdwg.mxu0
    %177 = vmatprep.subr.mxu0 0.0
    %178 = vmatpush1.msra.mxu0 %v75
    %179 = vmatprep.subr.mxu0 0.0
    %180 = vmatpush1.msra.mxu0 %v76
    %181 = vmatprep.subr.mxu0 0.0
    %182 = vmatpush1.msra.mxu0 %v77
    %183 = vmatprep.subr.mxu0 0.0
    %184 = vmatpush1.msra.mxu0 %v78
    %185 = vmatprep.subr.mxu0 0.0
    %186 = vmatpush1.msra.mxu0 %v79
    %187 = vmatprep.subr.mxu0 0.0
    %188 = vmatpush1.msra.mxu0 %v80
    %189 = vmatprep.subr.mxu0 0.0
    %190 = vmatpush1.msra.mxu0 %v81
    %191 = vmatprep.subr.mxu0 0.0
    %192 = vmatpush1.msra.mxu0 %v82
    %193 = vmatprep.subr.mxu0 0.0
    %194 = vmatpush1.msra.mxu0 %v83
    %195 = vmatprep.subr.mxu0 0.0
    %196 = vmatpush1.msra.mxu0 %v84
    %197 = vmatprep.subr.mxu0 0.0
    %198 = vmatpush1.msra.mxu0 %v85
    %199 = vmatprep.subr.mxu0 0.0
    %200 = vmatpush1.msra.mxu0 %v86
    %201 = vmatprep.subr.mxu0 0.0
    %202 = vmatpush1.msra.mxu0 %v87
    %203 = vmatprep.subr.mxu0 0.0
    %204 = vmatpush1.msra.mxu0 %v88
    %205 = vmatprep.subr.mxu0 0.0
    %206 = vmatpush1.msra.mxu0 %v89
    %207 = vmatprep.subr.mxu0 0.0
    %208 = vmatpush1.msra.mxu0 %v90
    %209 = vmatprep.subr.mxu0 0.0
    %210 = vmatpush1.msra.mxu0 0.0
    %211 = vmatprep.subr.mxu0 0.0
    %212 = vmatpush1.msra.mxu0 0.0
    %213 = vmatprep.subr.mxu0 0.0
    %214 = vmatpush1.msra.mxu0 0.0
    %215 = vmatprep.subr.mxu0 0.0
    %216 = vmatpush1.msra.mxu0 0.0
    %217 = vmatprep.subr.mxu0 0.0
    %218 = vmatpush1.msra.mxu0 0.0
    %219 = vmatprep.subr.mxu0 0.0
    %220 = vmatpush1.msra.mxu0 0.0
    %221 = vmatprep.subr.mxu0 0.0
    %222 = vmatpush1.msra.mxu0 0.0
    %223 = vmatprep.subr.mxu0 0.0
    %224 = vmatpush1.msra.mxu0 0.0
    %225 = vmatprep.subr.mxu0 0.0
    %226 = vmatpush1.msra.mxu0 0.0
    %227 = vmatprep.subr.mxu0 0.0
    %228 = vmatpush1.msra.mxu0 0.0
    %229 = vmatprep.subr.mxu0 0.0
    %230 = vmatpush1.msra.mxu0 0.0
    %231 = vmatprep.subr.mxu0 0.0
    %232 = vmatpush1.msra.mxu0 0.0
    %233 = vmatprep.subr.mxu0 0.0
    %234 = vmatpush1.msra.mxu0 0.0
    %235 = vmatprep.subr.mxu0 0.0
    %236 = vmatpush1.msra.mxu0 0.0
    %237 = vmatprep.subr.mxu0 0.0
    %238 = vmatpush1.msra.mxu0 0.0
    %239 = vmatprep.subr.mxu0 0.0
    %240 = vmatpush1.msra.mxu0 0.0
    %241 = vmatprep.mubr.f32.mxu0 0.0
    %242 = vmatmul.mubr.f32.gmra.mrb[0].mxu0 %v169
    %v243 = vpop.f32.mrb[0].mxu0
    %v244 = vadd.f32 0.0, %v243
    %v245 = vpop.f32.mrb[0].mxu0
    %246 = vmatprep.mubr.f32.mxu0 0.0
    %247 = vmatmul.mubr.f32.gmra.mrb[0].mxu0 %v174
    %v248 = vpop.f32.mrb[0].mxu0
    %v249 = vadd.f32 0.0, %v248
    %v250 = vpop.f32.mrb[0].mxu0
    %251 = vdwg.mxu0
    %252 = vst [vmem:[#allocation8] sm:$0xff] %v244
    %253 = vst [vmem:[#allocation8 + $0x8] sm:$0xff] %v249
    // Predicated region
    $region30: #{tpu_custom_call.1} parent=1 // pred_check
      _
    $region31: #{tpu_custom_call.1} parent=1 // pred_check_branch
      %255 = sbr.rel (0) target = $region33
    $region32: #{tpu_custom_call.1} parent=1 // pred_region
      %s257 = ssub.s32 256, 256
      %258 = vsyncadd [#allocation4], %s257
      %s259 = sshll.u32 [#allocation8], 4
      %s260 = int_to_ptr.vmem [resolvable:$true] %s259
      %265 = dma.vmem_to_hbm [thread:$0]  %s260, 256, %s4, [#allocation4], 128, 128, 8
    $region33: #{tpu_custom_call.1} parent=1 // pred_fallthru
      _
    // Predicated region
    $region34: #{tpu_custom_call.1} parent=1 // pred_check
      _
    $region35: #{tpu_custom_call.1} parent=1 // pred_check_branch
      %267 = sbr.rel (0) target = $region37
    $region36: #{tpu_custom_call.1} parent=1 // pred_region
      %268 = dma.done [#allocation4], 256
    $region37: #{tpu_custom_call.1} parent=1 // pred_fallthru
      _
    %269 = vsyncpa [#allocation3], 1
    %270 = vsyncpa [#allocation6], 1
    %271 = vsyncpa [#allocation4], 1

</llo_original>
